<compile_context>
chip_gen: v7x
topology: tpu7x:2x2x1
jax: 0.10.0
libtpu: 0.0.40
codegen_flags: <defaults>
</compile_context>

<pallas_src>
import jax
import jax.numpy as jnp
from jax.experimental import pallas as pl
from jax.experimental.pallas import tpu as pltpu


def _conv_gru_kernel(x_ref, h_ref,
                     wgx_ref, wbx_ref, wcx_ref,
                     wgh_ref, wbh_ref, wch_ref,
                     bg_ref, bb_ref, bc_ref,
                     out_ref, hnext_ref):
    x = x_ref[...]                       # (C, T), MXU operand in native dtype
    h = h_ref[...]                       # (C, T)

    def mm(w_ref, v):
        return jnp.dot(w_ref[...], v, preferred_element_type=jnp.float32)

    # Per-gate 1x1 convolutions as channel-first matmuls; f32 accumulation.
    gamma = mm(wgx_ref, x) + mm(wgh_ref, h) + bg_ref[...].astype(jnp.float32)
    reset_gate = jax.nn.sigmoid(gamma)        # f32 gate math (EUP)

    beta = mm(wbx_ref, x) + mm(wbh_ref, h) + bb_ref[...].astype(jnp.float32)
    update_gate = jax.nn.sigmoid(beta)

    h_f32 = h.astype(jnp.float32)
    rh = (reset_gate * h_f32).astype(h.dtype)  # MXU operand dtype for the can-conv
    cc = mm(wcx_ref, x) + mm(wch_ref, rh) + bc_ref[...].astype(jnp.float32)
    cnm = jnp.tanh(cc)

    # h_next = (1 - u) * h + u * cnm  ==  h + u * (cnm - h)
    h_next = h_f32 + update_gate * (cnm - h_f32)
    hnext_ref[...] = h_next.astype(hnext_ref.dtype)
    out_ref[...] = (x.astype(jnp.float32) + h_next).astype(out_ref.dtype)


def _vmem_capacity_bytes():
    try:
        return int(pltpu.get_tpu_info().vmem_capacity_bytes)
    except Exception:
        return 128 * 1024 * 1024


def _round_up(v, m):
    return ((v + m - 1) // m) * m


def _pick_tile_hw(HW, C, act_itemsize, desired, tile_budget_bytes):
    """Largest lane-dense spatial tile within the per-generation VMEM budget."""
    # Per spatial column: 4 streamed tiles (x, h, out, h_next) double-buffered
    # plus ~8 live f32 intermediate rows inside the kernel body.
    per_col = C * (2 * 4 * act_itemsize + 8 * 4)
    t = min(desired, HW)
    t = min(t, max(128, tile_budget_bytes // per_col))
    if t >= HW:
        return HW
    return max(128, (t // 128) * 128)


def conv_gru_forward(x_nchw, h_nchw, params, *, tile_hw=2048):
    """Single ConvGRUBlock (kernel_size=1) step. Returns (output, h_next), NCHW."""
    B, C, H, W = x_nchw.shape
    HW = H * W

    # Channel-first lane-dense layout: pure reshape, no NCHW<->NHWC transpose,
    # no padding and no output slicing (partial trailing block is handled by
    # the pipeline's clipped/masked DMAs).
    x = x_nchw.reshape(B, C, HW)
    h = h_nchw.reshape(B, C, HW)

    a_item = x.dtype.itemsize
    p_item = params["wgx"].dtype.itemsize

    # Generation-aware VMEM sizing (v7x: 64 MiB/TC; v5e/v6e: 128 MiB).
    vmem_cap = _vmem_capacity_bytes()
    if vmem_cap <= 80 * 1024 * 1024:          # v7x-class part
        tile_budget = 36 * 1024 * 1024
        vmem_cap_limit = 44 * 1024 * 1024
    else:                                     # v5e / v6e-class part
        tile_budget = 88 * 1024 * 1024
        vmem_cap_limit = 100 * 1024 * 1024

    tile_hw = _pick_tile_hw(HW, C, a_item, tile_hw, tile_budget)
    n_hw = pl.cdiv(HW, tile_hw)

    # v7x has 2 TensorCores sharing "parallel" grid axes: ensure at least two
    # grid cells when the problem allows it (no-op on single-TC v5e/v6e).
    if B == 1 and n_hw == 1 and HW > 128:
        tile_hw = max(128, _round_up((HW + 1) // 2, 128))
        n_hw = pl.cdiv(HW, tile_hw)

    grid = (B, n_hw)

    act_spec = pl.BlockSpec((None, C, tile_hw), lambda b, j: (b, 0, j))
    w_spec = pl.BlockSpec((C, C), lambda b, j: (0, 0))
    b_spec = pl.BlockSpec((C, 1), lambda b, j: (0, 0))
    # TODO(synk): mark the constant-index weight/bias specs with
    # pipeline_mode=pl.Buffered(1) to reclaim their second VMEM buffer on v7x.

    stream_bytes = 2 * 4 * C * tile_hw * a_item            # x,h,out,h_next double-buffered
    const_bytes = 2 * (6 * C * C + 3 * C) * p_item          # weights + biases
    interm_bytes = 8 * C * tile_hw * 4                      # live f32 rows in the body
    vmem_limit = int(min(vmem_cap_limit,
                         max(32 * 1024 * 1024,
                             (stream_bytes + const_bytes + interm_bytes) * 5 // 4)))

    N = B * HW
    cost = pl.CostEstimate(
        flops=2 * N * 6 * C * C + 10 * N * C,
        transcendentals=3 * N * C,
        bytes_accessed=4 * N * C * a_item + (6 * C * C + 3 * C) * p_item,
    )

    out, h_next = pl.pallas_call(
        _conv_gru_kernel,
        out_shape=(
            jax.ShapeDtypeStruct((B, C, HW), x_nchw.dtype),
            jax.ShapeDtypeStruct((B, C, HW), x_nchw.dtype),
        ),
        grid_spec=pltpu.PrefetchScalarGridSpec(
            num_scalar_prefetch=0,
            grid=grid,
            in_specs=[act_spec, act_spec,
                      w_spec, w_spec, w_spec, w_spec, w_spec, w_spec,
                      b_spec, b_spec, b_spec],
            out_specs=[act_spec, act_spec],
        ),
        compiler_params=pltpu.CompilerParams(
            dimension_semantics=("parallel", "parallel"),
            vmem_limit_bytes=vmem_limit,
        ),
        cost_estimate=cost,
    )(x, h,
      params["wgx"], params["wbx"], params["wcx"],
      params["wgh"], params["wbh"], params["wch"],
      params["bg"], params["bb"], params["bc"])

    return out.reshape(B, C, H, W), h_next.reshape(B, C, H, W)


def init_params(key, channels, dtype=jnp.float32):
    """Random params with PyTorch Conv2d (kernel_size=1) semantics, pre-split.

    conv_gates: weight (2C, 2C, 1, 1) -> Wg (2C_out, 2C_in), bias (2C,)
    conv_can:   weight (C,  2C, 1, 1) -> Wc (C_out,  2C_in), bias (C,)
    Split for the kernel's per-gate channel-first matmuls:
      wgx/wgh: gamma rows applied to x / h      wbx/wbh: beta rows
      wcx/wch: can-conv rows applied to x / reset*h
      bg/bb/bc: per-gate biases, each (C, 1)
    Returns (kernel_params, raw_params) where raw mirrors the PyTorch layout.
    """
    C = channels
    k1, k2, k3, k4 = jax.random.split(key, 4)
    wg = jax.random.normal(k1, (2 * C, 2 * C), jnp.float32) * 0.1
    bg = jax.random.normal(k2, (2 * C,), jnp.float32) * 0.1
    wc = jax.random.normal(k3, (C, 2 * C), jnp.float32) * 0.1
    bc = jax.random.normal(k4, (C,), jnp.float32) * 0.1

    kern = {
        "wgx": wg[:C, :C].astype(dtype), "wgh": wg[:C, C:].astype(dtype),
        "wbx": wg[C:, :C].astype(dtype), "wbh": wg[C:, C:].astype(dtype),
        "wcx": wc[:, :C].astype(dtype), "wch": wc[:, C:].astype(dtype),
        "bg": bg[:C].reshape(C, 1).astype(dtype),
        "bb": bg[C:].reshape(C, 1).astype(dtype),
        "bc": bc.reshape(C, 1).astype(dtype),
    }
    raw = {"wg": wg.astype(dtype), "bg": bg.astype(dtype),
           "wc": wc.astype(dtype), "bc": bc.astype(dtype)}
    return kern, raw


def _reference(x_nchw, h_nchw, raw):
    """Pure-JAX reference mirroring the PyTorch forward (uses unpacked weights)."""
    B, C, H, W = x_nchw.shape
    x = x_nchw.reshape(B, C, H * W).astype(jnp.float32)
    h = h_nchw.reshape(B, C, H * W).astype(jnp.float32)
    wg = raw["wg"].astype(jnp.float32)
    wc = raw["wc"].astype(jnp.float32)
    bg = raw["bg"].astype(jnp.float32)
    bc = raw["bc"].astype(jnp.float32)

    comb = jnp.concatenate([x, h], axis=1)                                # (B, 2C, HW)
    gates = jnp.einsum("oi,bis->bos", wg, comb) + bg[None, :, None]
    gamma, beta = gates[:, :C], gates[:, C:]
    r = jax.nn.sigmoid(gamma)
    u = jax.nn.sigmoid(beta)
    comb2 = jnp.concatenate([x, r * h], axis=1)
    cc = jnp.einsum("oi,bis->bos", wc, comb2) + bc[None, :, None]
    cnm = jnp.tanh(cc)
    h_next = (1.0 - u) * h + u * cnm
    out = x + h_next
    return (out.reshape(B, C, H, W).astype(x_nchw.dtype),
            h_next.reshape(B, C, H, W).astype(x_nchw.dtype))


if __name__ == "__main__":
    key = jax.random.PRNGKey(0)
    k_x, k_p, k_x2, k_h2, k_x3, k_h3 = jax.random.split(key, 6)

    # Case 1: module defaults — first call => h = zeros_like(inputs).
    B, C, H, W = 2, 4, 16, 16
    x = jax.random.normal(k_x, (B, C, H, W), jnp.float32)
    h0 = jnp.zeros_like(x)
    params, raw = init_params(k_p, C)

    out, h_next = conv_gru_forward(x, h0, params)
    out = jax.block_until_ready(out)
    h_next = jax.block_until_ready(h_next)
    out_ref, hn_ref = _reference(x, h0, raw)
    assert out.shape == (B, C, H, W) and h_next.shape == (B, C, H, W)
    assert jnp.allclose(out, out_ref, atol=1e-5, rtol=1e-5), "out mismatch vs reference"
    assert jnp.allclose(h_next, hn_ref, atol=1e-5, rtol=1e-5), "h_next mismatch vs reference"

    # Case 2: second step with a nonzero hidden state and a ragged spatial extent
    # (H*W not a multiple of the tile) — exercises the no-pad partial-block path.
    H2, W2 = 16, 20
    x2 = jax.random.normal(k_x2, (B, C, H2, W2), jnp.float32)
    h2 = jax.random.normal(k_h2, (B, C, H2, W2), jnp.float32)
    out2, h_next2 = conv_gru_forward(x2, h2, params, tile_hw=128)
    out2 = jax.block_until_ready(out2)
    h_next2 = jax.block_until_ready(h_next2)
    out2_ref, hn2_ref = _reference(x2, h2, raw)
    assert jnp.allclose(out2, out2_ref, atol=1e-5, rtol=1e-5), "ragged out mismatch"
    assert jnp.allclose(h_next2, hn2_ref, atol=1e-5, rtol=1e-5), "ragged h_next mismatch"

    # Case 3: bf16 activation/weight streaming (f32 gate math inside) with B=1,
    # which also exercises the forced 2-cell spatial split for v7x megacore.
    params_bf, raw_bf = init_params(k_p, C, dtype=jnp.bfloat16)
    x3 = jax.random.normal(k_x3, (1, C, H, W), jnp.float32).astype(jnp.bfloat16)
    h3 = jax.random.normal(k_h3, (1, C, H, W), jnp.float32).astype(jnp.bfloat16)
    out3, h_next3 = conv_gru_forward(x3, h3, params_bf)
    out3 = jax.block_until_ready(out3)
    h_next3 = jax.block_until_ready(h_next3)
    out3_ref, hn3_ref = _reference(x3, h3, raw_bf)
    assert jnp.allclose(out3.astype(jnp.float32), out3_ref.astype(jnp.float32),
                        atol=5e-2, rtol=5e-2), "bf16 out mismatch"
    assert jnp.allclose(h_next3.astype(jnp.float32), hn3_ref.astype(jnp.float32),
                        atol=5e-2, rtol=5e-2), "bf16 h_next mismatch"

    print("KERNEL_OK")
</pallas_src>

<mosaic_0001>
module attributes {stable_mosaic.version = 11 : i64} {
  func.func @_conv_gru_kernel(%arg0: i32, %arg1: i32, %arg2: memref<1x4x256xf32, #tpu.memory_space<vmem>>, %arg3: memref<1x4x256xf32, #tpu.memory_space<vmem>>, %arg4: memref<4x4xf32, #tpu.memory_space<vmem>>, %arg5: memref<4x4xf32, #tpu.memory_space<vmem>>, %arg6: memref<4x4xf32, #tpu.memory_space<vmem>>, %arg7: memref<4x4xf32, #tpu.memory_space<vmem>>, %arg8: memref<4x4xf32, #tpu.memory_space<vmem>>, %arg9: memref<4x4xf32, #tpu.memory_space<vmem>>, %arg10: memref<4x1xf32, #tpu.memory_space<vmem>>, %arg11: memref<4x1xf32, #tpu.memory_space<vmem>>, %arg12: memref<4x1xf32, #tpu.memory_space<vmem>>, %arg13: memref<1x4x256xf32, #tpu.memory_space<vmem>>, %arg14: memref<1x4x256xf32, #tpu.memory_space<vmem>>) attributes {dimension_semantics = [#tpu.dimension_semantics<parallel>, #tpu.dimension_semantics<parallel>], iteration_bounds = array<i64: 2, 1>, scalar_prefetch = 0 : i64, scratch_operands = 0 : i64, tpu.core_type = #tpu.core_type<tc>, window_params = [{transform_indices = @transform_0, window_bounds = array<i64: 1, 4, 256>}, {transform_indices = @transform_1, window_bounds = array<i64: 1, 4, 256>}, {pipeline_mode = #tpu.pipeline_mode<synchronous>, transform_indices = @transform_2, window_bounds = array<i64: 4, 4>}, {pipeline_mode = #tpu.pipeline_mode<synchronous>, transform_indices = @transform_3, window_bounds = array<i64: 4, 4>}, {pipeline_mode = #tpu.pipeline_mode<synchronous>, transform_indices = @transform_4, window_bounds = array<i64: 4, 4>}, {pipeline_mode = #tpu.pipeline_mode<synchronous>, transform_indices = @transform_5, window_bounds = array<i64: 4, 4>}, {pipeline_mode = #tpu.pipeline_mode<synchronous>, transform_indices = @transform_6, window_bounds = array<i64: 4, 4>}, {pipeline_mode = #tpu.pipeline_mode<synchronous>, transform_indices = @transform_7, window_bounds = array<i64: 4, 4>}, {pipeline_mode = #tpu.pipeline_mode<synchronous>, transform_indices = @transform_8, window_bounds = array<i64: 4, 1>}, {pipeline_mode = #tpu.pipeline_mode<synchronous>, transform_indices = @transform_9, window_bounds = array<i64: 4, 1>}, {pipeline_mode = #tpu.pipeline_mode<synchronous>, transform_indices = @transform_10, window_bounds = array<i64: 4, 1>}, {transform_indices = @transform_11, window_bounds = array<i64: 1, 4, 256>}, {transform_indices = @transform_12, window_bounds = array<i64: 1, 4, 256>}]} {
    %c0 = arith.constant 0 : index
    %c0_0 = arith.constant 0 : index
    %c0_1 = arith.constant 0 : index
    %0 = vector.load %arg2[%c0, %c0_0, %c0_1] : memref<1x4x256xf32, #tpu.memory_space<vmem>>, vector<1x4x256xf32>
    %1 = vector.shape_cast %0 : vector<1x4x256xf32> to vector<4x256xf32>
    %c0_2 = arith.constant 0 : index
    %c0_3 = arith.constant 0 : index
    %c0_4 = arith.constant 0 : index
    %2 = vector.load %arg3[%c0_2, %c0_3, %c0_4] : memref<1x4x256xf32, #tpu.memory_space<vmem>>, vector<1x4x256xf32>
    %3 = vector.shape_cast %2 : vector<1x4x256xf32> to vector<4x256xf32>
    %c0_5 = arith.constant 0 : index
    %c0_6 = arith.constant 0 : index
    %4 = vector.load %arg4[%c0_5, %c0_6] : memref<4x4xf32, #tpu.memory_space<vmem>>, vector<4x4xf32>
    %cst = arith.constant dense<0.000000e+00> : vector<4x256xf32>
    %5 = tpu.matmul %4, %1, %cst {dimension_numbers = #tpu.dot_dimension_numbers<[1], [0], [0], [1], [0, 0, 1, 1], [], []>} : vector<4x4xf32>, vector<4x256xf32>, vector<4x256xf32> -> vector<4x256xf32>
    %c0_7 = arith.constant 0 : index
    %c0_8 = arith.constant 0 : index
    %6 = vector.load %arg7[%c0_7, %c0_8] : memref<4x4xf32, #tpu.memory_space<vmem>>, vector<4x4xf32>
    %cst_9 = arith.constant dense<0.000000e+00> : vector<4x256xf32>
    %7 = tpu.matmul %6, %3, %cst_9 {dimension_numbers = #tpu.dot_dimension_numbers<[1], [0], [0], [1], [0, 0, 1, 1], [], []>} : vector<4x4xf32>, vector<4x256xf32>, vector<4x256xf32> -> vector<4x256xf32>
    %8 = arith.addf %5, %7 : vector<4x256xf32>
    %c0_10 = arith.constant 0 : index
    %c0_11 = arith.constant 0 : index
    %9 = vector.load %arg10[%c0_10, %c0_11] : memref<4x1xf32, #tpu.memory_space<vmem>>, vector<4x1xf32>
    %10 = vector.broadcast %9 : vector<4x1xf32> to vector<4x256xf32>
    %11 = arith.addf %8, %10 : vector<4x256xf32>
    %12 = arith.negf %11 : vector<4x256xf32>
    %13 = math.exp %12 : vector<4x256xf32>
    %cst_12 = arith.constant 1.000000e+00 : f32
    %14 = vector.broadcast %cst_12 : f32 to vector<4x256xf32>
    %15 = arith.addf %14, %13 : vector<4x256xf32>
    %16 = arith.divf %14, %15 : vector<4x256xf32>
    %c0_13 = arith.constant 0 : index
    %c0_14 = arith.constant 0 : index
    %17 = vector.load %arg5[%c0_13, %c0_14] : memref<4x4xf32, #tpu.memory_space<vmem>>, vector<4x4xf32>
    %cst_15 = arith.constant dense<0.000000e+00> : vector<4x256xf32>
    %18 = tpu.matmul %17, %1, %cst_15 {dimension_numbers = #tpu.dot_dimension_numbers<[1], [0], [0], [1], [0, 0, 1, 1], [], []>} : vector<4x4xf32>, vector<4x256xf32>, vector<4x256xf32> -> vector<4x256xf32>
    %c0_16 = arith.constant 0 : index
    %c0_17 = arith.constant 0 : index
    %19 = vector.load %arg8[%c0_16, %c0_17] : memref<4x4xf32, #tpu.memory_space<vmem>>, vector<4x4xf32>
    %cst_18 = arith.constant dense<0.000000e+00> : vector<4x256xf32>
    %20 = tpu.matmul %19, %3, %cst_18 {dimension_numbers = #tpu.dot_dimension_numbers<[1], [0], [0], [1], [0, 0, 1, 1], [], []>} : vector<4x4xf32>, vector<4x256xf32>, vector<4x256xf32> -> vector<4x256xf32>
    %21 = arith.addf %18, %20 : vector<4x256xf32>
    %c0_19 = arith.constant 0 : index
    %c0_20 = arith.constant 0 : index
    %22 = vector.load %arg11[%c0_19, %c0_20] : memref<4x1xf32, #tpu.memory_space<vmem>>, vector<4x1xf32>
    %23 = vector.broadcast %22 : vector<4x1xf32> to vector<4x256xf32>
    %24 = arith.addf %21, %23 : vector<4x256xf32>
    %25 = arith.negf %24 : vector<4x256xf32>
    %26 = math.exp %25 : vector<4x256xf32>
    %cst_21 = arith.constant 1.000000e+00 : f32
    %27 = vector.broadcast %cst_21 : f32 to vector<4x256xf32>
    %28 = arith.addf %27, %26 : vector<4x256xf32>
    %29 = arith.divf %27, %28 : vector<4x256xf32>
    %30 = arith.mulf %16, %3 : vector<4x256xf32>
    %c0_22 = arith.constant 0 : index
    %c0_23 = arith.constant 0 : index
    %31 = vector.load %arg6[%c0_22, %c0_23] : memref<4x4xf32, #tpu.memory_space<vmem>>, vector<4x4xf32>
    %cst_24 = arith.constant dense<0.000000e+00> : vector<4x256xf32>
    %32 = tpu.matmul %31, %1, %cst_24 {dimension_numbers = #tpu.dot_dimension_numbers<[1], [0], [0], [1], [0, 0, 1, 1], [], []>} : vector<4x4xf32>, vector<4x256xf32>, vector<4x256xf32> -> vector<4x256xf32>
    %c0_25 = arith.constant 0 : index
    %c0_26 = arith.constant 0 : index
    %33 = vector.load %arg9[%c0_25, %c0_26] : memref<4x4xf32, #tpu.memory_space<vmem>>, vector<4x4xf32>
    %cst_27 = arith.constant dense<0.000000e+00> : vector<4x256xf32>
    %34 = tpu.matmul %33, %30, %cst_27 {dimension_numbers = #tpu.dot_dimension_numbers<[1], [0], [0], [1], [0, 0, 1, 1], [], []>} : vector<4x4xf32>, vector<4x256xf32>, vector<4x256xf32> -> vector<4x256xf32>
    %35 = arith.addf %32, %34 : vector<4x256xf32>
    %c0_28 = arith.constant 0 : index
    %c0_29 = arith.constant 0 : index
    %36 = vector.load %arg12[%c0_28, %c0_29] : memref<4x1xf32, #tpu.memory_space<vmem>>, vector<4x1xf32>
    %37 = vector.broadcast %36 : vector<4x1xf32> to vector<4x256xf32>
    %38 = arith.addf %35, %37 : vector<4x256xf32>
    %39 = math.tanh %38 : vector<4x256xf32>
    %40 = arith.subf %39, %3 : vector<4x256xf32>
    %41 = arith.mulf %29, %40 : vector<4x256xf32>
    %42 = arith.addf %3, %41 : vector<4x256xf32>
    %c0_30 = arith.constant 0 : index
    %c0_31 = arith.constant 0 : index
    %c0_32 = arith.constant 0 : index
    %43 = vector.load %arg14[%c0_30, %c0_31, %c0_32] : memref<1x4x256xf32, #tpu.memory_space<vmem>>, vector<1x4x256xf32>
    %44 = vector.shape_cast %43 : vector<1x4x256xf32> to vector<4x256xf32>
    %45 = vector.shape_cast %42 : vector<4x256xf32> to vector<1x4x256xf32>
    tpu.vector_store %arg14[%c0_30, %c0_31, %c0_32], %45 {strides = array<i32>} : memref<1x4x256xf32, #tpu.memory_space<vmem>>, vector<1x4x256xf32>,
    %46 = arith.addf %1, %42 : vector<4x256xf32>
    %c0_33 = arith.constant 0 : index
    %c0_34 = arith.constant 0 : index
    %c0_35 = arith.constant 0 : index
    %47 = vector.load %arg13[%c0_33, %c0_34, %c0_35] : memref<1x4x256xf32, #tpu.memory_space<vmem>>, vector<1x4x256xf32>
    %48 = vector.shape_cast %47 : vector<1x4x256xf32> to vector<4x256xf32>
    %49 = vector.shape_cast %46 : vector<4x256xf32> to vector<1x4x256xf32>
    tpu.vector_store %arg13[%c0_33, %c0_34, %c0_35], %49 {strides = array<i32>} : memref<1x4x256xf32, #tpu.memory_space<vmem>>, vector<1x4x256xf32>,
    return
  }
  func.func @transform_0(%arg0: i32, %arg1: i32) -> (i32, i32, i32) {
    %c0_i32 = arith.constant 0 : i32
    %c0_i32_0 = arith.constant 0 : i32
    return %arg0, %c0_i32, %arg1 : i32, i32, i32
  }
  func.func @transform_1(%arg0: i32, %arg1: i32) -> (i32, i32, i32) {
    %c0_i32 = arith.constant 0 : i32
    %c0_i32_0 = arith.constant 0 : i32
    return %arg0, %c0_i32, %arg1 : i32, i32, i32
  }
  func.func @transform_2(%arg0: i32, %arg1: i32) -> (i32, i32) {
    %c0_i32 = arith.constant 0 : i32
    %c0_i32_0 = arith.constant 0 : i32
    %c0_i32_1 = arith.constant 0 : i32
    return %c0_i32, %c0_i32_0 : i32, i32
  }
  func.func @transform_3(%arg0: i32, %arg1: i32) -> (i32, i32) {
    %c0_i32 = arith.constant 0 : i32
    %c0_i32_0 = arith.constant 0 : i32
    %c0_i32_1 = arith.constant 0 : i32
    return %c0_i32, %c0_i32_0 : i32, i32
  }
  func.func @transform_4(%arg0: i32, %arg1: i32) -> (i32, i32) {
    %c0_i32 = arith.constant 0 : i32
    %c0_i32_0 = arith.constant 0 : i32
    %c0_i32_1 = arith.constant 0 : i32
    return %c0_i32, %c0_i32_0 : i32, i32
  }
  func.func @transform_5(%arg0: i32, %arg1: i32) -> (i32, i32) {
    %c0_i32 = arith.constant 0 : i32
    %c0_i32_0 = arith.constant 0 : i32
    %c0_i32_1 = arith.constant 0 : i32
    return %c0_i32, %c0_i32_0 : i32, i32
  }
  func.func @transform_6(%arg0: i32, %arg1: i32) -> (i32, i32) {
    %c0_i32 = arith.constant 0 : i32
    %c0_i32_0 = arith.constant 0 : i32
    %c0_i32_1 = arith.constant 0 : i32
    return %c0_i32, %c0_i32_0 : i32, i32
  }
  func.func @transform_7(%arg0: i32, %arg1: i32) -> (i32, i32) {
    %c0_i32 = arith.constant 0 : i32
    %c0_i32_0 = arith.constant 0 : i32
    %c0_i32_1 = arith.constant 0 : i32
    return %c0_i32, %c0_i32_0 : i32, i32
  }
  func.func @transform_8(%arg0: i32, %arg1: i32) -> (i32, i32) {
    %c0_i32 = arith.constant 0 : i32
    %c0_i32_0 = arith.constant 0 : i32
    %c0_i32_1 = arith.constant 0 : i32
    return %c0_i32, %c0_i32_0 : i32, i32
  }
  func.func @transform_9(%arg0: i32, %arg1: i32) -> (i32, i32) {
    %c0_i32 = arith.constant 0 : i32
    %c0_i32_0 = arith.constant 0 : i32
    %c0_i32_1 = arith.constant 0 : i32
    return %c0_i32, %c0_i32_0 : i32, i32
  }
  func.func @transform_10(%arg0: i32, %arg1: i32) -> (i32, i32) {
    %c0_i32 = arith.constant 0 : i32
    %c0_i32_0 = arith.constant 0 : i32
    %c0_i32_1 = arith.constant 0 : i32
    return %c0_i32, %c0_i32_0 : i32, i32
  }
  func.func @transform_11(%arg0: i32, %arg1: i32) -> (i32, i32, i32) {
    %c0_i32 = arith.constant 0 : i32
    %c0_i32_0 = arith.constant 0 : i32
    return %arg0, %c0_i32, %arg1 : i32, i32, i32
  }
  func.func @transform_12(%arg0: i32, %arg1: i32) -> (i32, i32, i32) {
    %c0_i32 = arith.constant 0 : i32
    %c0_i32_0 = arith.constant 0 : i32
    return %arg0, %c0_i32, %arg1 : i32, i32, i32
  }
}

</mosaic_0001>

<llo_original>
// kernel: tpu_custom_call.1
$region0: #{tpu_custom_call.1}
  #allocation0 [shape = 'u32[]', space=smem, size = 0x4, offset = 0x4, fixed_abs, tag = 'smem constant byte address 0x4 - core index']
  #allocation1 [shape = 'u32[144,128]{1,0:T(1,128)}', space=vmem, size = 0x12000, scoped, tag = 'internal scratch']
  %s0 = inlined_call_operand.hbm [shape: f32[2,4,256], index: 0, kind: input, shape index: {}]
  %s1 = inlined_call_operand.vmem [shape: f32[2,4,256], index: 1, kind: input, shape index: {}]
  %s2 = inlined_call_operand.vmem [shape: f32[4,4], index: 2, kind: input, shape index: {}]
  %s3 = inlined_call_operand.vmem [shape: f32[4,4], index: 3, kind: input, shape index: {}]
  %s4 = inlined_call_operand.vmem [shape: f32[4,4], index: 4, kind: input, shape index: {}]
  %s5 = inlined_call_operand.vmem [shape: f32[4,4], index: 5, kind: input, shape index: {}]
  %s6 = inlined_call_operand.vmem [shape: f32[4,4], index: 6, kind: input, shape index: {}]
  %s7 = inlined_call_operand.vmem [shape: f32[4,4], index: 7, kind: input, shape index: {}]
  %s8 = inlined_call_operand.vmem [shape: f32[4,1], index: 8, kind: input, shape index: {}]
  %s9 = inlined_call_operand.vmem [shape: f32[4,1], index: 9, kind: input, shape index: {}]
  %s10 = inlined_call_operand.vmem [shape: f32[4,1], index: 10, kind: input, shape index: {}]
  %s11 = inlined_call_operand.hbm [shape: f32[2,4,256], index: 11, kind: output, shape index: {0}]
  %s12 = inlined_call_operand.hbm [shape: f32[2,4,256], index: 12, kind: output, shape index: {1}]
  %13 = xla_tuple %s11, %s12
  %s14 = sld [smem:[#allocation0]]
  $region89: #{tpu_custom_call.1} parent=0
    _
  %s16 = ssub.s32 1, %s14
  %s17 = scalar_select 0, %s16, %s14
  $region1: #{tpu_custom_call.1} parent=0
    #allocation2 [shape = 'u8[8192]{0}', space=vmem, size = 0x2000, scoped, tag = 'input window, operand 0']
    #allocation3 [shape = 's32[2]{0}', space=sflag, size = 0x8, scoped, tag = 'scoped memory for tpu_custom_call.1']
    #allocation4 [shape = 's32[2]{0}', space=sflag, size = 0x8, scoped, tag = 'scoped memory for tpu_custom_call.1']
    #allocation5 [shape = 'u8[8192]{0}', space=vmem, size = 0x2000, scoped, tag = 'output window, operand 0']
    #allocation6 [shape = 'u8[8192]{0}', space=vmem, size = 0x2000, scoped, tag = 'output window, operand 1']
    #allocation7 [shape = 's32[2]{0}', space=sflag, size = 0x8, scoped, tag = 'scoped memory for tpu_custom_call.1']
    %18 = vsyncpa [#allocation3], 0
    %s19 = scalar_lea.sflag [#allocation3], 1
    %20 = vsyncpa %s19, 0
    %21 = vsyncpa [#allocation4], 0
    %s22 = scalar_lea.sflag [#allocation4], 1
    %23 = vsyncpa %s22, 0
    %24 = vsyncpa [#allocation7], 0
    %s25 = scalar_lea.sflag [#allocation7], 1
    %26 = vsyncpa %s25, 0
    loop: start=0, step=1, limit=4
    $region2: #{tpu_custom_call.1} parent=1 // loop_pre_header
      _
    $region3: #{tpu_custom_call.1} parent=1 // loop_header
      %s28 = sphi 0, %s32
      %p29 = scmp.ge.s32.totalorder %s28, 4
      %s35 = sphi 0, %s47
      %s36 = sphi 0, %s43
      %s37 = sphi 0, %s35
      %s38 = sphi 0, %s36
      %s39 = sphi 0, %s37
      %s40 = sphi 0, %s38
      %s52 = sphi 0, %s54
      %s55 = sphi 0, %s52
      %s56 = sphi 0, %s55
      %s72 = sphi 0, %s56
      %s80 = sphi 0, %s82
      %s83 = sphi 0, %s80
      %s84 = sphi 0, %s83
      %s100 = sphi 0, %s84
      %s104 = sphi 0, %s104
      %s106 = sphi 0, %s104
      %s107 = sphi 0, %s106
      %s121 = sphi 0, %s107
      %s125 = sphi 0, %s125
      %s127 = sphi 0, %s125
      %s128 = sphi 0, %s127
      %s142 = sphi 0, %s128
      %s146 = sphi 0, %s146
      %s148 = sphi 0, %s146
      %s149 = sphi 0, %s148
      %s163 = sphi 0, %s149
      %s167 = sphi 0, %s167
      %s169 = sphi 0, %s167
      %s170 = sphi 0, %s169
      %s184 = sphi 0, %s170
      %s188 = sphi 0, %s188
      %s190 = sphi 0, %s188
      %s191 = sphi 0, %s190
      %s205 = sphi 0, %s191
      %s209 = sphi 0, %s209
      %s211 = sphi 0, %s209
      %s212 = sphi 0, %s211
      %s226 = sphi 0, %s212
      %s230 = sphi 0, %s230
      %s232 = sphi 0, %s230
      %s233 = sphi 0, %s232
      %s247 = sphi 0, %s233
      %s251 = sphi 0, %s251
      %s253 = sphi 0, %s251
      %s254 = sphi 0, %s253
      %s268 = sphi 0, %s254
      %s272 = sphi 0, %s272
      %s274 = sphi 0, %s272
      %s275 = sphi 0, %s274
      %s289 = sphi 0, %s275
      %s297 = sphi 0, %s299
      %s300 = sphi 0, %s297
      %s301 = sphi 0, %s300
      %s317 = sphi 0, %s301
      %s325 = sphi 0, %s327
      %s328 = sphi 0, %s325
      %s329 = sphi 0, %s328
      %s345 = sphi 0, %s329
    $region4: #{tpu_custom_call.1} parent=1 // loop_header_branch
      %31 = sbr.rel (%p29) target = $region8
    $region5: #{tpu_custom_call.1} parent=1 // loop_body
      %s33 = ssub.s32 %s28, 1
      %s34 = ssub.s32 %s28, 2
      %s41 = sadd.s32 1, %s36
      %p42 = scmp.ge.s32.totalorder %s41, 1
      %s43 = scalar_select %p42, 0, %s41
      %s44 = sadd.s32 1, %s35
      %s45 = scalar_select %p42, %s44, %s35
      %p46 = scmp.ge.s32.totalorder %s45, 2
      %s47 = scalar_select %p46, 0, %s45
      %s48 = ssub.s32 %s35, %s47
      %s49 = ssub.s32 %s36, %s43
      %s50 = sor.u32 %s48, %s49
      %p51 = scmp.eq.s32.totalorder %s50, 0
      %s53 = sadd.s32 %s52, 1
      %s54 = scalar_select %p51, %s52, %s53
      %p57 = pneg %p51
      %p58 = scmp.eq.s32.totalorder %s28, 1
      %p59 = por %p57, %p58
      %p60 = scmp.ne.s32.totalorder %s52, %s55
      %p61 = scmp.eq.s32.totalorder %s28, 0
      %p62 = por %p60, %p61
      %p63 = scmp.ne.s32.totalorder %s52, %s55
      %p64 = scmp.eq.s32.totalorder %s33, 1
      %p65 = por %p63, %p64
      %p66 = scmp.ne.s32.totalorder %s55, %s56
      %p67 = scmp.eq.s32.totalorder %s33, 0
      %p68 = por %p66, %p67
      %p69 = scmp.ne.s32.totalorder %s55, %s56
      %p70 = scmp.eq.s32.totalorder %s34, 1
      %p71 = por %p69, %p70
      %p73 = scmp.ne.s32.totalorder %s56, %s72
      %p74 = scmp.eq.s32.totalorder %s34, 0
      %p75 = por %p73, %p74
      %s76 = ssub.s32 %s35, %s47
      %s77 = ssub.s32 %s36, %s43
      %s78 = sor.u32 %s76, %s77
      %p79 = scmp.eq.s32.totalorder %s78, 0
      %s81 = sadd.s32 %s80, 1
      %s82 = scalar_select %p79, %s80, %s81
      %p85 = pneg %p79
      %p86 = scmp.eq.s32.totalorder %s28, 1
      %p87 = por %p85, %p86
      %p88 = scmp.ne.s32.totalorder %s80, %s83
      %p89 = scmp.eq.s32.totalorder %s28, 0
      %p90 = por %p88, %p89
      %p91 = scmp.ne.s32.totalorder %s80, %s83
      %p92 = scmp.eq.s32.totalorder %s33, 1
      %p93 = por %p91, %p92
      %p94 = scmp.ne.s32.totalorder %s83, %s84
      %p95 = scmp.eq.s32.totalorder %s33, 0
      %p96 = por %p94, %p95
      %p97 = scmp.ne.s32.totalorder %s83, %s84
      %p98 = scmp.eq.s32.totalorder %s34, 1
      %p99 = por %p97, %p98
      %p101 = scmp.ne.s32.totalorder %s84, %s100
      %p102 = scmp.eq.s32.totalorder %s34, 0
      %p103 = por %p101, %p102
      %s105 = sadd.s32 %s104, 1
      %p108 = scmp.eq.s32.totalorder %s28, 1
      %p109 = scmp.ne.s32.totalorder %s104, %s106
      %p110 = scmp.eq.s32.totalorder %s28, 0
      %p111 = por %p109, %p110
      %p112 = scmp.ne.s32.totalorder %s104, %s106
      %p113 = scmp.eq.s32.totalorder %s33, 1
      %p114 = por %p112, %p113
      %p115 = scmp.ne.s32.totalorder %s106, %s107
      %p116 = scmp.eq.s32.totalorder %s33, 0
      %p117 = por %p115, %p116
      %p118 = scmp.ne.s32.totalorder %s106, %s107
      %p119 = scmp.eq.s32.totalorder %s34, 1
      %p120 = por %p118, %p119
      %p122 = scmp.ne.s32.totalorder %s107, %s121
      %p123 = scmp.eq.s32.totalorder %s34, 0
      %p124 = por %p122, %p123
      %s126 = sadd.s32 %s125, 1
      %p129 = scmp.eq.s32.totalorder %s28, 1
      %p130 = scmp.ne.s32.totalorder %s125, %s127
      %p131 = scmp.eq.s32.totalorder %s28, 0
      %p132 = por %p130, %p131
      %p133 = scmp.ne.s32.totalorder %s125, %s127
      %p134 = scmp.eq.s32.totalorder %s33, 1
      %p135 = por %p133, %p134
      %p136 = scmp.ne.s32.totalorder %s127, %s128
      %p137 = scmp.eq.s32.totalorder %s33, 0
      %p138 = por %p136, %p137
      %p139 = scmp.ne.s32.totalorder %s127, %s128
      %p140 = scmp.eq.s32.totalorder %s34, 1
      %p141 = por %p139, %p140
      %p143 = scmp.ne.s32.totalorder %s128, %s142
      %p144 = scmp.eq.s32.totalorder %s34, 0
      %p145 = por %p143, %p144
      %s147 = sadd.s32 %s146, 1
      %p150 = scmp.eq.s32.totalorder %s28, 1
      %p151 = scmp.ne.s32.totalorder %s146, %s148
      %p152 = scmp.eq.s32.totalorder %s28, 0
      %p153 = por %p151, %p152
      %p154 = scmp.ne.s32.totalorder %s146, %s148
      %p155 = scmp.eq.s32.totalorder %s33, 1
      %p156 = por %p154, %p155
      %p157 = scmp.ne.s32.totalorder %s148, %s149
      %p158 = scmp.eq.s32.totalorder %s33, 0
      %p159 = por %p157, %p158
      %p160 = scmp.ne.s32.totalorder %s148, %s149
      %p161 = scmp.eq.s32.totalorder %s34, 1
      %p162 = por %p160, %p161
      %p164 = scmp.ne.s32.totalorder %s149, %s163
      %p165 = scmp.eq.s32.totalorder %s34, 0
      %p166 = por %p164, %p165
      %s168 = sadd.s32 %s167, 1
      %p171 = scmp.eq.s32.totalorder %s28, 1
      %p172 = scmp.ne.s32.totalorder %s167, %s169
      %p173 = scmp.eq.s32.totalorder %s28, 0
      %p174 = por %p172, %p173
      %p175 = scmp.ne.s32.totalorder %s167, %s169
      %p176 = scmp.eq.s32.totalorder %s33, 1
      %p177 = por %p175, %p176
      %p178 = scmp.ne.s32.totalorder %s169, %s170
      %p179 = scmp.eq.s32.totalorder %s33, 0
      %p180 = por %p178, %p179
      %p181 = scmp.ne.s32.totalorder %s169, %s170
      %p182 = scmp.eq.s32.totalorder %s34, 1
      %p183 = por %p181, %p182
      %p185 = scmp.ne.s32.totalorder %s170, %s184
      %p186 = scmp.eq.s32.totalorder %s34, 0
      %p187 = por %p185, %p186
      %s189 = sadd.s32 %s188, 1
      %p192 = scmp.eq.s32.totalorder %s28, 1
      %p193 = scmp.ne.s32.totalorder %s188, %s190
      %p194 = scmp.eq.s32.totalorder %s28, 0
      %p195 = por %p193, %p194
      %p196 = scmp.ne.s32.totalorder %s188, %s190
      %p197 = scmp.eq.s32.totalorder %s33, 1
      %p198 = por %p196, %p197
      %p199 = scmp.ne.s32.totalorder %s190, %s191
      %p200 = scmp.eq.s32.totalorder %s33, 0
      %p201 = por %p199, %p200
      %p202 = scmp.ne.s32.totalorder %s190, %s191
      %p203 = scmp.eq.s32.totalorder %s34, 1
      %p204 = por %p202, %p203
      %p206 = scmp.ne.s32.totalorder %s191, %s205
      %p207 = scmp.eq.s32.totalorder %s34, 0
      %p208 = por %p206, %p207
      %s210 = sadd.s32 %s209, 1
      %p213 = scmp.eq.s32.totalorder %s28, 1
      %p214 = scmp.ne.s32.totalorder %s209, %s211
      %p215 = scmp.eq.s32.totalorder %s28, 0
      %p216 = por %p214, %p215
      %p217 = scmp.ne.s32.totalorder %s209, %s211
      %p218 = scmp.eq.s32.totalorder %s33, 1
      %p219 = por %p217, %p218
      %p220 = scmp.ne.s32.totalorder %s211, %s212
      %p221 = scmp.eq.s32.totalorder %s33, 0
      %p222 = por %p220, %p221
      %p223 = scmp.ne.s32.totalorder %s211, %s212
      %p224 = scmp.eq.s32.totalorder %s34, 1
      %p225 = por %p223, %p224
      %p227 = scmp.ne.s32.totalorder %s212, %s226
      %p228 = scmp.eq.s32.totalorder %s34, 0
      %p229 = por %p227, %p228
      %s231 = sadd.s32 %s230, 1
      %p234 = scmp.eq.s32.totalorder %s28, 1
      %p235 = scmp.ne.s32.totalorder %s230, %s232
      %p236 = scmp.eq.s32.totalorder %s28, 0
      %p237 = por %p235, %p236
      %p238 = scmp.ne.s32.totalorder %s230, %s232
      %p239 = scmp.eq.s32.totalorder %s33, 1
      %p240 = por %p238, %p239
      %p241 = scmp.ne.s32.totalorder %s232, %s233
      %p242 = scmp.eq.s32.totalorder %s33, 0
      %p243 = por %p241, %p242
      %p244 = scmp.ne.s32.totalorder %s232, %s233
      %p245 = scmp.eq.s32.totalorder %s34, 1
      %p246 = por %p244, %p245
      %p248 = scmp.ne.s32.totalorder %s233, %s247
      %p249 = scmp.eq.s32.totalorder %s34, 0
      %p250 = por %p248, %p249
      %s252 = sadd.s32 %s251, 1
      %p255 = scmp.eq.s32.totalorder %s28, 1
      %p256 = scmp.ne.s32.totalorder %s251, %s253
      %p257 = scmp.eq.s32.totalorder %s28, 0
      %p258 = por %p256, %p257
      %p259 = scmp.ne.s32.totalorder %s251, %s253
      %p260 = scmp.eq.s32.totalorder %s33, 1
      %p261 = por %p259, %p260
      %p262 = scmp.ne.s32.totalorder %s253, %s254
      %p263 = scmp.eq.s32.totalorder %s33, 0
      %p264 = por %p262, %p263
      %p265 = scmp.ne.s32.totalorder %s253, %s254
      %p266 = scmp.eq.s32.totalorder %s34, 1
      %p267 = por %p265, %p266
      %p269 = scmp.ne.s32.totalorder %s254, %s268
      %p270 = scmp.eq.s32.totalorder %s34, 0
      %p271 = por %p269, %p270
      %s273 = sadd.s32 %s272, 1
      %p276 = scmp.eq.s32.totalorder %s28, 1
      %p277 = scmp.ne.s32.totalorder %s272, %s274
      %p278 = scmp.eq.s32.totalorder %s28, 0
      %p279 = por %p277, %p278
      %p280 = scmp.ne.s32.totalorder %s272, %s274
      %p281 = scmp.eq.s32.totalorder %s33, 1
      %p282 = por %p280, %p281
      %p283 = scmp.ne.s32.totalorder %s274, %s275
      %p284 = scmp.eq.s32.totalorder %s33, 0
      %p285 = por %p283, %p284
      %p286 = scmp.ne.s32.totalorder %s274, %s275
      %p287 = scmp.eq.s32.totalorder %s34, 1
      %p288 = por %p286, %p287
      %p290 = scmp.ne.s32.totalorder %s275, %s289
      %p291 = scmp.eq.s32.totalorder %s34, 0
      %p292 = por %p290, %p291
      %s293 = ssub.s32 %s35, %s47
      %s294 = ssub.s32 %s36, %s43
      %s295 = sor.u32 %s293, %s294
      %p296 = scmp.eq.s32.totalorder %s295, 0
      %s298 = sadd.s32 %s297, 1
      %s299 = scalar_select %p296, %s297, %s298
      %p302 = pneg %p296
      %p303 = scmp.eq.s32.totalorder %s28, 1
      %p304 = por %p302, %p303
      %p305 = scmp.ne.s32.totalorder %s297, %s300
      %p306 = scmp.eq.s32.totalorder %s28, 0
      %p307 = por %p305, %p306
      %p308 = scmp.ne.s32.totalorder %s297, %s300
      %p309 = scmp.eq.s32.totalorder %s33, 1
      %p310 = por %p308, %p309
      %p311 = scmp.ne.s32.totalorder %s300, %s301
      %p312 = scmp.eq.s32.totalorder %s33, 0
      %p313 = por %p311, %p312
      %p314 = scmp.ne.s32.totalorder %s300, %s301
      %p315 = scmp.eq.s32.totalorder %s34, 1
      %p316 = por %p314, %p315
      %p318 = scmp.ne.s32.totalorder %s301, %s317
      %p319 = scmp.eq.s32.totalorder %s34, 0
      %p320 = por %p318, %p319
      %s321 = ssub.s32 %s35, %s47
      %s322 = ssub.s32 %s36, %s43
      %s323 = sor.u32 %s321, %s322
      %p324 = scmp.eq.s32.totalorder %s323, 0
      %s326 = sadd.s32 %s325, 1
      %s327 = scalar_select %p324, %s325, %s326
      %p330 = pneg %p324
      %p331 = scmp.eq.s32.totalorder %s28, 1
      %p332 = por %p330, %p331
      %p333 = scmp.ne.s32.totalorder %s325, %s328
      %p334 = scmp.eq.s32.totalorder %s28, 0
      %p335 = por %p333, %p334
      %p336 = scmp.ne.s32.totalorder %s325, %s328
      %p337 = scmp.eq.s32.totalorder %s33, 1
      %p338 = por %p336, %p337
      %p339 = scmp.ne.s32.totalorder %s328, %s329
      %p340 = scmp.eq.s32.totalorder %s33, 0
      %p341 = por %p339, %p340
      %p342 = scmp.ne.s32.totalorder %s328, %s329
      %p343 = scmp.eq.s32.totalorder %s34, 1
      %p344 = por %p342, %p343
      %p346 = scmp.ne.s32.totalorder %s329, %s345
      %p347 = scmp.eq.s32.totalorder %s34, 0
      %p348 = por %p346, %p347
      %p349 = scmp.le.s32.totalorder 1, %s28
      %p350 = scmp.lt.s32.totalorder %s28, 3
      %p351 = pnand %p349, %p350
      %p352 = pneg %p351
      // Predicated region
      $region9: #{tpu_custom_call.1} parent=5 // pred_check
        _
      $region10: #{tpu_custom_call.1} parent=5 // pred_check_branch
        %354 = sbr.rel (%p351) target = $region12
      $region11: #{tpu_custom_call.1} parent=5 // pred_region
        %s355 = ssub.s32 %s28, 1
        // Predicated region
        $region13: #{tpu_custom_call.1} parent=11 // pred_check
          %p356 = pneg %p117
        $region14: #{tpu_custom_call.1} parent=11 // pred_check_branch
          %358 = sbr.rel (%p356) target = $region16
        $region15: #{tpu_custom_call.1} parent=11 // pred_region
          _
        $region16: #{tpu_custom_call.1} parent=11 // pred_fallthru
          _
        // Predicated region
        $region17: #{tpu_custom_call.1} parent=11 // pred_check
          %p359 = pneg %p138
        $region18: #{tpu_custom_call.1} parent=11 // pred_check_branch
          %361 = sbr.rel (%p359) target = $region20
        $region19: #{tpu_custom_call.1} parent=11 // pred_region
          _
        $region20: #{tpu_custom_call.1} parent=11 // pred_fallthru
          _
        // Predicated region
        $region21: #{tpu_custom_call.1} parent=11 // pred_check
          %p362 = pneg %p159
        $region22: #{tpu_custom_call.1} parent=11 // pred_check_branch
          %364 = sbr.rel (%p362) target = $region24
        $region23: #{tpu_custom_call.1} parent=11 // pred_region
          _
        $region24: #{tpu_custom_call.1} parent=11 // pred_fallthru
          _
        // Predicated region
        $region25: #{tpu_custom_call.1} parent=11 // pred_check
          %p365 = pneg %p180
        $region26: #{tpu_custom_call.1} parent=11 // pred_check_branch
          %367 = sbr.rel (%p365) target = $region28
        $region27: #{tpu_custom_call.1} parent=11 // pred_region
          _
        $region28: #{tpu_custom_call.1} parent=11 // pred_fallthru
          _
        // Predicated region
        $region29: #{tpu_custom_call.1} parent=11 // pred_check
          %p368 = pneg %p201
        $region30: #{tpu_custom_call.1} parent=11 // pred_check_branch
          %370 = sbr.rel (%p368) target = $region32
        $region31: #{tpu_custom_call.1} parent=11 // pred_region
          _
        $region32: #{tpu_custom_call.1} parent=11 // pred_fallthru
          _
        // Predicated region
        $region33: #{tpu_custom_call.1} parent=11 // pred_check
          %p371 = pneg %p222
        $region34: #{tpu_custom_call.1} parent=11 // pred_check_branch
          %373 = sbr.rel (%p371) target = $region36
        $region35: #{tpu_custom_call.1} parent=11 // pred_region
          _
        $region36: #{tpu_custom_call.1} parent=11 // pred_fallthru
          _
        // Predicated region
        $region37: #{tpu_custom_call.1} parent=11 // pred_check
          %p374 = pneg %p243
        $region38: #{tpu_custom_call.1} parent=11 // pred_check_branch
          %376 = sbr.rel (%p374) target = $region40
        $region39: #{tpu_custom_call.1} parent=11 // pred_region
          _
        $region40: #{tpu_custom_call.1} parent=11 // pred_fallthru
          _
        // Predicated region
        $region41: #{tpu_custom_call.1} parent=11 // pred_check
          %p377 = pneg %p264
        $region42: #{tpu_custom_call.1} parent=11 // pred_check_branch
          %379 = sbr.rel (%p377) target = $region44
        $region43: #{tpu_custom_call.1} parent=11 // pred_region
          _
        $region44: #{tpu_custom_call.1} parent=11 // pred_fallthru
          _
        // Predicated region
        $region45: #{tpu_custom_call.1} parent=11 // pred_check
          %p380 = pneg %p285
        $region46: #{tpu_custom_call.1} parent=11 // pred_check_branch
          %382 = sbr.rel (%p380) target = $region48
        $region47: #{tpu_custom_call.1} parent=11 // pred_region
          _
        $region48: #{tpu_custom_call.1} parent=11 // pred_fallthru
          _
      $region12: #{tpu_custom_call.1} parent=5 // pred_fallthru
        _
      %p383 = scmp.lt.s32.totalorder %s28, 2
      // Predicated region
      $region49: #{tpu_custom_call.1} parent=5 // pred_check
        %p384 = pneg %p383
      $region50: #{tpu_custom_call.1} parent=5 // pred_check_branch
        %386 = sbr.rel (%p384) target = $region52
      $region51: #{tpu_custom_call.1} parent=5 // pred_region
        // Predicated region
        $region53: #{tpu_custom_call.1} parent=51 // pred_check
          %p387 = pneg %p62
        $region54: #{tpu_custom_call.1} parent=51 // pred_check_branch
          %389 = sbr.rel (%p387) target = $region56
        $region55: #{tpu_custom_call.1} parent=51 // pred_region
          %s390 = sand.u32 %s52, 1
          %s391 = scalar_lea.sflag [#allocation3], %s390
          %s392 = sand.u32 %s52, 1
          %s393 = smul.addr %s392, 8
          %s394 = scalar_lea.vmem [#allocation2], %s393
          %s395 = smul.u32 2, %s36
          %s397 = ssub.s32 128, 128
          %398 = vsyncadd %s391, %s397
          %s399 = smul.addr %s35, 2
          %s400 = sadd.s32 %s395, %s399
          %s401 = smul.addr %s400, 64
          %s402 = scalar_lea.hbm %s0, %s401
          %s404 = sshll.u32 %s394, 4
          %s405 = int_to_ptr.vmem [resolvable:$true] %s404
          %407 = dma.hbm_to_vmem [thread:$0]  %s402, 128, %s405, %s391
        $region56: #{tpu_custom_call.1} parent=51 // pred_fallthru
          _
        // Predicated region
        $region57: #{tpu_custom_call.1} parent=51 // pred_check
          %p408 = pneg %p90
        $region58: #{tpu_custom_call.1} parent=51 // pred_check_branch
          %410 = sbr.rel (%p408) target = $region60
        $region59: #{tpu_custom_call.1} parent=51 // pred_region
          %s411 = smul.u32 2, %s36
          %p412 = scmp.lt.s32.totalorder %s35, 1
          %s413 = scalar_select %p412, %s35, 1
          %p414 = scmp.lt.s32.totalorder %s411, 1
          %s415 = scalar_select %p414, %s411, 1
          %s416 = smul.addr %s413, 2
          %s417 = sadd.s32 %s415, %s416
          %s418 = smul.addr %s417, 4
          %s419 = scalar_lea.vmem %s1, %s418
          %s420 = smul.u32 2, %s36
        $region60: #{tpu_custom_call.1} parent=51 // pred_fallthru
          _
      $region52: #{tpu_custom_call.1} parent=5 // pred_fallthru
        _
      %p421 = scmp.le.s32.totalorder 1, %s28
      %p422 = scmp.lt.s32.totalorder %s28, 3
      %p423 = pnand %p421, %p422
      %p424 = pneg %p423
      // Predicated region
      $region61: #{tpu_custom_call.1} parent=5 // pred_check
        _
      $region62: #{tpu_custom_call.1} parent=5 // pred_check_branch
        %426 = sbr.rel (%p423) target = $region64
      $region63: #{tpu_custom_call.1} parent=5 // pred_region
        %s427 = ssub.s32 %s28, 1
        %s428 = sand.u32 %s55, 1
        %s429 = scalar_lea.sflag [#allocation3], %s428
        %s430 = sand.u32 %s55, 1
        %s431 = smul.addr %s430, 8
        %s432 = scalar_lea.vmem [#allocation2], %s431
        // Predicated region
        $region65: #{tpu_custom_call.1} parent=63 // pred_check
          %p433 = pneg %p68
        $region66: #{tpu_custom_call.1} parent=63 // pred_check_branch
          %435 = sbr.rel (%p433) target = $region68
        $region67: #{tpu_custom_call.1} parent=63 // pred_region
          %436 = dma.done %s429, 128
        $region68: #{tpu_custom_call.1} parent=63 // pred_fallthru
          _
        %s437 = sand.u32 %s55, 1
        %s438 = scalar_lea.sflag [#allocation3], %s437
        %s439 = sand.u32 %s55, 1
        %s440 = smul.addr %s439, 8
        %s441 = scalar_lea.vmem [#allocation2], %s440
        %p442 = pneg %p68
        %p443 = pneg %p65
        %s444 = smul.u32 2, %s38
        %p445 = scmp.lt.s32.totalorder %s37, 1
        %s446 = scalar_select %p445, %s37, 1
        %p447 = scmp.lt.s32.totalorder %s444, 1
        %s448 = scalar_select %p447, %s444, 1
        %s449 = smul.addr %s446, 2
        %s450 = sadd.s32 %s448, %s449
        %s451 = smul.addr %s450, 4
        %s452 = scalar_lea.vmem %s1, %s451
        %p453 = pneg %p96
        %p454 = pneg %p93
        %p455 = pneg %p117
        %p456 = pneg %p114
        %p457 = pneg %p138
        %p458 = pneg %p135
        %p459 = pneg %p159
        %p460 = pneg %p156
        %p461 = pneg %p180
        %p462 = pneg %p177
        %p463 = pneg %p201
        %p464 = pneg %p198
        %p465 = pneg %p222
        %p466 = pneg %p219
        %p467 = pneg %p243
        %p468 = pneg %p240
        %p469 = pneg %p264
        %p470 = pneg %p261
        %p471 = pneg %p285
        %p472 = pneg %p282
        %p473 = pneg %p313
        %p474 = pneg %p310
        %s475 = sand.u32 %s300, 1
        %s476 = scalar_lea.sflag [#allocation4], %s475
        %s477 = sand.u32 %s300, 1
        %s478 = smul.addr %s477, 8
        %s479 = scalar_lea.vmem [#allocation5], %s478
        %p480 = pneg %p341
        %p481 = pneg %p338
        %s482 = sand.u32 %s328, 1
        %s483 = scalar_lea.sflag [#allocation7], %s482
        %s484 = sand.u32 %s328, 1
        %s485 = smul.addr %s484, 8
        %s486 = scalar_lea.vmem [#allocation6], %s485
        %s487 = smul.u32 2, %s38
        %s488 = smul.u32 2, %s38
        %p489 = scmp.lt.s32.totalorder %s37, 1
        %s490 = scalar_select %p489, %s37, 1
        %p491 = scmp.lt.s32.totalorder %s488, 1
        %s492 = scalar_select %p491, %s488, 1
        %s493 = smul.addr %s490, 2
        %s494 = sadd.s32 %s492, %s493
        %s495 = smul.addr %s494, 4
        %s496 = scalar_lea.vmem %s1, %s495
        %s497 = smul.u32 2, %s38
        %s498 = smul.u32 2, %s38
        %s499 = smul.u32 2, %s38
        %v500 = vld [vmem:[%s432] sm:$0xff]
        %v501 = vld [vmem:[%s496] sm:$0xff]
        %v502 = vld [vmem:[%s2] sm:$0xf]
        %v503 = vld [vmem:[%s5] sm:$0xf]
        %v505 = vcombine.high %v501, %v501
        %vm506 = vcmask 31744
        %v508 = vsel %vm506, %v503, 0
        %vm510 = vcmask 1043456
        %v511 = vsel %vm510, %v501, 0
        %v513 = vsel %vm510, %v505, 0
        %515 = vmatprep.subr.mxu0 %v513
        %516 = vmatpush1.msra.mxu0 %v511
        %517 = vmatprep.subr.mxu0 0.0
        %518 = vmatpush1.msra.mxu0 0.0
        %519 = vmatprep.subr.mxu0 0.0
        %520 = vmatpush1.msra.mxu0 0.0
        %521 = vmatprep.subr.mxu0 0.0
        %522 = vmatpush1.msra.mxu0 0.0
        %523 = vmatprep.subr.mxu0 0.0
        %524 = vmatpush1.msra.mxu0 0.0
        %525 = vmatprep.subr.mxu0 0.0
        %526 = vmatpush1.msra.mxu0 0.0
        %527 = vmatprep.subr.mxu0 0.0
        %528 = vmatpush1.msra.mxu0 0.0
        %529 = vmatprep.subr.mxu0 0.0
        %530 = vmatpush1.msra.mxu0 0.0
        %531 = vmatprep.subr.mxu0 0.0
        %532 = vmatpush1.msra.mxu0 0.0
        %533 = vmatprep.subr.mxu0 0.0
        %534 = vmatpush1.msra.mxu0 0.0
        %535 = vmatprep.subr.mxu0 0.0
        %536 = vmatpush1.msra.mxu0 0.0
        %537 = vmatprep.subr.mxu0 0.0
        %538 = vmatpush1.msra.mxu0 0.0
        %539 = vmatprep.subr.mxu0 0.0
        %540 = vmatpush1.msra.mxu0 0.0
        %541 = vmatprep.subr.mxu0 0.0
        %542 = vmatpush1.msra.mxu0 0.0
        %543 = vmatprep.subr.mxu0 0.0
        %544 = vmatpush1.msra.mxu0 0.0
        %545 = vmatprep.subr.mxu0 0.0
        %546 = vmatpush1.msra.mxu0 0.0
        %547 = vmatprep.subr.mxu0 0.0
        %548 = vmatpush1.msra.mxu0 0.0
        %549 = vmatprep.subr.mxu0 0.0
        %550 = vmatpush1.msra.mxu0 0.0
        %551 = vmatprep.subr.mxu0 0.0
        %552 = vmatpush1.msra.mxu0 0.0
        %553 = vmatprep.subr.mxu0 0.0
        %554 = vmatpush1.msra.mxu0 0.0
        %555 = vmatprep.subr.mxu0 0.0
        %556 = vmatpush1.msra.mxu0 0.0
        %557 = vmatprep.subr.mxu0 0.0
        %558 = vmatpush1.msra.mxu0 0.0
        %559 = vmatprep.subr.mxu0 0.0
        %560 = vmatpush1.msra.mxu0 0.0
        %561 = vmatprep.subr.mxu0 0.0
        %562 = vmatpush1.msra.mxu0 0.0
        %563 = vmatprep.subr.mxu0 0.0
        %564 = vmatpush1.msra.mxu0 0.0
        %565 = vmatprep.subr.mxu0 0.0
        %566 = vmatpush1.msra.mxu0 0.0
        %567 = vmatprep.subr.mxu0 0.0
        %568 = vmatpush1.msra.mxu0 0.0
        %569 = vmatprep.subr.mxu0 0.0
        %570 = vmatpush1.msra.mxu0 0.0
        %571 = vmatprep.subr.mxu0 0.0
        %572 = vmatpush1.msra.mxu0 0.0
        %573 = vmatprep.subr.mxu0 0.0
        %574 = vmatpush1.msra.mxu0 0.0
        %575 = vmatprep.subr.mxu0 0.0
        %576 = vmatpush1.msra.mxu0 0.0
        %577 = vmatprep.subr.mxu0 0.0
        %578 = vmatpush1.msra.mxu0 0.0
        %579 = vmatprep.mubr.f32.mxu0 0.0
        %580 = vmatmul.mubr.f32.gmra.mrb[0].mxu0 %v508
        %v581 = vpop.f32.mrb[0].mxu0
        %v582 = vadd.f32 0.0, %v581
        %v583 = vpop.f32.mrb[0].mxu0
        %v584 = vadd.f32 0.0, %v583
        %585 = vdwg.mxu0
        %v587 = vcombine.high %v500, %v500
        %v589 = vsel %vm506, %v502, 0
        %v591 = vsel %vm510, %v500, 0
        %v593 = vsel %vm510, %v587, 0
        %595 = vmatprep.subr.mxu0 %v593
        %596 = vmatpush1.msra.mxu0 %v591
        %597 = vmatprep.subr.mxu0 0.0
        %598 = vmatpush1.msra.mxu0 0.0
        %599 = vmatprep.subr.mxu0 0.0
        %600 = vmatpush1.msra.mxu0 0.0
        %601 = vmatprep.subr.mxu0 0.0
        %602 = vmatpush1.msra.mxu0 0.0
        %603 = vmatprep.subr.mxu0 0.0
        %604 = vmatpush1.msra.mxu0 0.0
        %605 = vmatprep.subr.mxu0 0.0
        %606 = vmatpush1.msra.mxu0 0.0
        %607 = vmatprep.subr.mxu0 0.0
        %608 = vmatpush1.msra.mxu0 0.0
        %609 = vmatprep.subr.mxu0 0.0
        %610 = vmatpush1.msra.mxu0 0.0
        %611 = vmatprep.subr.mxu0 0.0
        %612 = vmatpush1.msra.mxu0 0.0
        %613 = vmatprep.subr.mxu0 0.0
        %614 = vmatpush1.msra.mxu0 0.0
        %615 = vmatprep.subr.mxu0 0.0
        %616 = vmatpush1.msra.mxu0 0.0
        %617 = vmatprep.subr.mxu0 0.0
        %618 = vmatpush1.msra.mxu0 0.0
        %619 = vmatprep.subr.mxu0 0.0
        %620 = vmatpush1.msra.mxu0 0.0
        %621 = vmatprep.subr.mxu0 0.0
        %622 = vmatpush1.msra.mxu0 0.0
        %623 = vmatprep.subr.mxu0 0.0
        %624 = vmatpush1.msra.mxu0 0.0
        %625 = vmatprep.subr.mxu0 0.0
        %626 = vmatpush1.msra.mxu0 0.0
        %627 = vmatprep.subr.mxu0 0.0
        %628 = vmatpush1.msra.mxu0 0.0
        %629 = vmatprep.subr.mxu0 0.0
        %630 = vmatpush1.msra.mxu0 0.0
        %631 = vmatprep.subr.mxu0 0.0
        %632 = vmatpush1.msra.mxu0 0.0
        %633 = vmatprep.subr.mxu0 0.0
        %634 = vmatpush1.msra.mxu0 0.0
        %635 = vmatprep.subr.mxu0 0.0
        %636 = vmatpush1.msra.mxu0 0.0
        %637 = vmatprep.subr.mxu0 0.0
        %638 = vmatpush1.msra.mxu0 0.0
        %639 = vmatprep.subr.mxu0 0.0
        %640 = vmatpush1.msra.mxu0 0.0
        %641 = vmatprep.subr.mxu0 0.0
        %642 = vmatpush1.msra.mxu0 0.0
        %643 = vmatprep.subr.mxu0 0.0
        %644 = vmatpush1.msra.mxu0 0.0
        %645 = vmatprep.subr.mxu0 0.0
        %646 = vmatpush1.msra.mxu0 0.0
        %647 = vmatprep.subr.mxu0 0.0
        %648 = vmatpush1.msra.mxu0 0.0
        %649 = vmatprep.subr.mxu0 0.0
        %650 = vmatpush1.msra.mxu0 0.0
        %651 = vmatprep.subr.mxu0 0.0
        %652 = vmatpush1.msra.mxu0 0.0
        %653 = vmatprep.subr.mxu0 0.0
        %654 = vmatpush1.msra.mxu0 0.0
        %655 = vmatprep.subr.mxu0 0.0
        %656 = vmatpush1.msra.mxu0 0.0
        %657 = vmatprep.subr.mxu0 0.0
        %658 = vmatpush1.msra.mxu0 0.0
        %659 = vmatprep.mubr.f32.mxu0 0.0
        %660 = vmatmul.mubr.f32.gmra.mrb[0].mxu0 %v589
        %v661 = vpop.f32.mrb[0].mxu0
        %v662 = vadd.f32 %v582, %v661
        %v663 = vpop.f32.mrb[0].mxu0
        %v664 = vadd.f32 %v584, %v663
        %665 = vdwg.mxu0
        %v666 = vld [vmem:[%s8] sm:$0xf]
        %668 = vset.pattern.permute.xlu0 0
        %669 = vperm.xlu0 %668, %v666
        %v670 = vpop.permute.xlu0 %669
        %v672 = vadd.f32 %v662, %v670
        %v673 = vadd.f32 %v664, %v670
        %v674 = vxor.u32 %v672, 2147483648
        %v675 = vxor.u32 %v673, 2147483648
        %v676 = vmul.f32 %v674, 1.442695
        %v677 = vpow.pop %v676
        %v678 = vmul.f32 %v675, 1.442695
        %v679 = vpow.pop %v678
        %v680 = vadd.f32 %v677, 1.0
        %v681 = vadd.f32 %v679, 1.0
        %v682 = vrcp.pop %v680
        %v683 = vmul.f32 1.0, %v682
        %v684 = vrcp.pop %v681
        %v685 = vmul.f32 1.0, %v684
        %v686 = vld [vmem:[%s3] sm:$0xf]
        %v687 = vld [vmem:[%s6] sm:$0xf]
        %v689 = vsel %vm506, %v687, 0
        %691 = vmatprep.subr.mxu0 %v513
        %692 = vmatpush1.msra.mxu0 %v511
        %693 = vmatprep.subr.mxu0 0.0
        %694 = vmatpush1.msra.mxu0 0.0
        %695 = vmatprep.subr.mxu0 0.0
        %696 = vmatpush1.msra.mxu0 0.0
        %697 = vmatprep.subr.mxu0 0.0
        %698 = vmatpush1.msra.mxu0 0.0
        %699 = vmatprep.subr.mxu0 0.0
        %700 = vmatpush1.msra.mxu0 0.0
        %701 = vmatprep.subr.mxu0 0.0
        %702 = vmatpush1.msra.mxu0 0.0
        %703 = vmatprep.subr.mxu0 0.0
        %704 = vmatpush1.msra.mxu0 0.0
        %705 = vmatprep.subr.mxu0 0.0
        %706 = vmatpush1.msra.mxu0 0.0
        %707 = vmatprep.subr.mxu0 0.0
        %708 = vmatpush1.msra.mxu0 0.0
        %709 = vmatprep.subr.mxu0 0.0
        %710 = vmatpush1.msra.mxu0 0.0
        %711 = vmatprep.subr.mxu0 0.0
        %712 = vmatpush1.msra.mxu0 0.0
        %713 = vmatprep.subr.mxu0 0.0
        %714 = vmatpush1.msra.mxu0 0.0
        %715 = vmatprep.subr.mxu0 0.0
        %716 = vmatpush1.msra.mxu0 0.0
        %717 = vmatprep.subr.mxu0 0.0
        %718 = vmatpush1.msra.mxu0 0.0
        %719 = vmatprep.subr.mxu0 0.0
        %720 = vmatpush1.msra.mxu0 0.0
        %721 = vmatprep.subr.mxu0 0.0
        %722 = vmatpush1.msra.mxu0 0.0
        %723 = vmatprep.subr.mxu0 0.0
        %724 = vmatpush1.msra.mxu0 0.0
        %725 = vmatprep.subr.mxu0 0.0
        %726 = vmatpush1.msra.mxu0 0.0
        %727 = vmatprep.subr.mxu0 0.0
        %728 = vmatpush1.msra.mxu0 0.0
        %729 = vmatprep.subr.mxu0 0.0
        %730 = vmatpush1.msra.mxu0 0.0
        %731 = vmatprep.subr.mxu0 0.0
        %732 = vmatpush1.msra.mxu0 0.0
        %733 = vmatprep.subr.mxu0 0.0
        %734 = vmatpush1.msra.mxu0 0.0
        %735 = vmatprep.subr.mxu0 0.0
        %736 = vmatpush1.msra.mxu0 0.0
        %737 = vmatprep.subr.mxu0 0.0
        %738 = vmatpush1.msra.mxu0 0.0
        %739 = vmatprep.subr.mxu0 0.0
        %740 = vmatpush1.msra.mxu0 0.0
        %741 = vmatprep.subr.mxu0 0.0
        %742 = vmatpush1.msra.mxu0 0.0
        %743 = vmatprep.subr.mxu0 0.0
        %744 = vmatpush1.msra.mxu0 0.0
        %745 = vmatprep.subr.mxu0 0.0
        %746 = vmatpush1.msra.mxu0 0.0
        %747 = vmatprep.subr.mxu0 0.0
        %748 = vmatpush1.msra.mxu0 0.0
        %749 = vmatprep.subr.mxu0 0.0
        %750 = vmatpush1.msra.mxu0 0.0
        %751 = vmatprep.subr.mxu0 0.0
        %752 = vmatpush1.msra.mxu0 0.0
        %753 = vmatprep.subr.mxu0 0.0
        %754 = vmatpush1.msra.mxu0 0.0
        %755 = vmatprep.mubr.f32.mxu0 0.0
        %756 = vmatmul.mubr.f32.gmra.mrb[0].mxu0 %v689
        %v757 = vpop.f32.mrb[0].mxu0
        %v758 = vadd.f32 0.0, %v757
        %v759 = vpop.f32.mrb[0].mxu0
        %v760 = vadd.f32 0.0, %v759
        %761 = vdwg.mxu0
        %v763 = vsel %vm506, %v686, 0
        %765 = vmatprep.subr.mxu0 %v593
        %766 = vmatpush1.msra.mxu0 %v591
        %767 = vmatprep.subr.mxu0 0.0
        %768 = vmatpush1.msra.mxu0 0.0
        %769 = vmatprep.subr.mxu0 0.0
        %770 = vmatpush1.msra.mxu0 0.0
        %771 = vmatprep.subr.mxu0 0.0
        %772 = vmatpush1.msra.mxu0 0.0
        %773 = vmatprep.subr.mxu0 0.0
        %774 = vmatpush1.msra.mxu0 0.0
        %775 = vmatprep.subr.mxu0 0.0
        %776 = vmatpush1.msra.mxu0 0.0
        %777 = vmatprep.subr.mxu0 0.0
        %778 = vmatpush1.msra.mxu0 0.0
        %779 = vmatprep.subr.mxu0 0.0
        %780 = vmatpush1.msra.mxu0 0.0
        %781 = vmatprep.subr.mxu0 0.0
        %782 = vmatpush1.msra.mxu0 0.0
        %783 = vmatprep.subr.mxu0 0.0
        %784 = vmatpush1.msra.mxu0 0.0
        %785 = vmatprep.subr.mxu0 0.0
        %786 = vmatpush1.msra.mxu0 0.0
        %787 = vmatprep.subr.mxu0 0.0
        %788 = vmatpush1.msra.mxu0 0.0
        %789 = vmatprep.subr.mxu0 0.0
        %790 = vmatpush1.msra.mxu0 0.0
        %791 = vmatprep.subr.mxu0 0.0
        %792 = vmatpush1.msra.mxu0 0.0
        %793 = vmatprep.subr.mxu0 0.0
        %794 = vmatpush1.msra.mxu0 0.0
        %795 = vmatprep.subr.mxu0 0.0
        %796 = vmatpush1.msra.mxu0 0.0
        %797 = vmatprep.subr.mxu0 0.0
        %798 = vmatpush1.msra.mxu0 0.0
        %799 = vmatprep.subr.mxu0 0.0
        %800 = vmatpush1.msra.mxu0 0.0
        %801 = vmatprep.subr.mxu0 0.0
        %802 = vmatpush1.msra.mxu0 0.0
        %803 = vmatprep.subr.mxu0 0.0
        %804 = vmatpush1.msra.mxu0 0.0
        %805 = vmatprep.subr.mxu0 0.0
        %806 = vmatpush1.msra.mxu0 0.0
        %807 = vmatprep.subr.mxu0 0.0
        %808 = vmatpush1.msra.mxu0 0.0
        %809 = vmatprep.subr.mxu0 0.0
        %810 = vmatpush1.msra.mxu0 0.0
        %811 = vmatprep.subr.mxu0 0.0
        %812 = vmatpush1.msra.mxu0 0.0
        %813 = vmatprep.subr.mxu0 0.0
        %814 = vmatpush1.msra.mxu0 0.0
        %815 = vmatprep.subr.mxu0 0.0
        %816 = vmatpush1.msra.mxu0 0.0
        %817 = vmatprep.subr.mxu0 0.0
        %818 = vmatpush1.msra.mxu0 0.0
        %819 = vmatprep.subr.mxu0 0.0
        %820 = vmatpush1.msra.mxu0 0.0
        %821 = vmatprep.subr.mxu0 0.0
        %822 = vmatpush1.msra.mxu0 0.0
        %823 = vmatprep.subr.mxu0 0.0
        %824 = vmatpush1.msra.mxu0 0.0
        %825 = vmatprep.subr.mxu0 0.0
        %826 = vmatpush1.msra.mxu0 0.0
        %827 = vmatprep.subr.mxu0 0.0
        %828 = vmatpush1.msra.mxu0 0.0
        %829 = vmatprep.mubr.f32.mxu0 0.0
        %830 = vmatmul.mubr.f32.gmra.mrb[0].mxu0 %v763
        %v831 = vpop.f32.mrb[0].mxu0
        %v832 = vadd.f32 %v758, %v831
        %v833 = vpop.f32.mrb[0].mxu0
        %v834 = vadd.f32 %v760, %v833
        %835 = vdwg.mxu0
        %v836 = vld [vmem:[%s9] sm:$0xf]
        %838 = vset.pattern.permute.xlu0 0
        %839 = vperm.xlu0 %838, %v836
        %v840 = vpop.permute.xlu0 %839
        %v842 = vadd.f32 %v832, %v840
        %v843 = vadd.f32 %v834, %v840
        %v844 = vxor.u32 %v842, 2147483648
        %v845 = vxor.u32 %v843, 2147483648
        %v846 = vmul.f32 %v844, 1.442695
        %v847 = vpow.pop %v846
        %v848 = vmul.f32 %v845, 1.442695
        %v849 = vpow.pop %v848
        %v850 = vadd.f32 %v847, 1.0
        %v851 = vadd.f32 %v849, 1.0
        %v852 = vrcp.pop %v850
        %v853 = vmul.f32 1.0, %v852
        %v854 = vrcp.pop %v851
        %v855 = vmul.f32 1.0, %v854
        %v857 = vmul.f32 %v683, %v501
        %v858 = vmul.f32 %v685, %v505
        %v859 = vld [vmem:[%s4] sm:$0xf]
        %v860 = vld [vmem:[%s7] sm:$0xf]
        %v862 = vsel %vm506, %v860, 0
        %v865 = vsel %vm510, %v857, 0
        %v868 = vsel %vm510, %v858, 0
        %870 = vmatprep.subr.mxu0 %v868
        %871 = vmatpush1.msra.mxu0 %v865
        %872 = vmatprep.subr.mxu0 0.0
        %873 = vmatpush1.msra.mxu0 0.0
        %874 = vmatprep.subr.mxu0 0.0
        %875 = vmatpush1.msra.mxu0 0.0
        %876 = vmatprep.subr.mxu0 0.0
        %877 = vmatpush1.msra.mxu0 0.0
        %878 = vmatprep.subr.mxu0 0.0
        %879 = vmatpush1.msra.mxu0 0.0
        %880 = vmatprep.subr.mxu0 0.0
        %881 = vmatpush1.msra.mxu0 0.0
        %882 = vmatprep.subr.mxu0 0.0
        %883 = vmatpush1.msra.mxu0 0.0
        %884 = vmatprep.subr.mxu0 0.0
        %885 = vmatpush1.msra.mxu0 0.0
        %886 = vmatprep.subr.mxu0 0.0
        %887 = vmatpush1.msra.mxu0 0.0
        %888 = vmatprep.subr.mxu0 0.0
        %889 = vmatpush1.msra.mxu0 0.0
        %890 = vmatprep.subr.mxu0 0.0
        %891 = vmatpush1.msra.mxu0 0.0
        %892 = vmatprep.subr.mxu0 0.0
        %893 = vmatpush1.msra.mxu0 0.0
        %894 = vmatprep.subr.mxu0 0.0
        %895 = vmatpush1.msra.mxu0 0.0
        %896 = vmatprep.subr.mxu0 0.0
        %897 = vmatpush1.msra.mxu0 0.0
        %898 = vmatprep.subr.mxu0 0.0
        %899 = vmatpush1.msra.mxu0 0.0
        %900 = vmatprep.subr.mxu0 0.0
        %901 = vmatpush1.msra.mxu0 0.0
        %902 = vmatprep.subr.mxu0 0.0
        %903 = vmatpush1.msra.mxu0 0.0
        %904 = vmatprep.subr.mxu0 0.0
        %905 = vmatpush1.msra.mxu0 0.0
        %906 = vmatprep.subr.mxu0 0.0
        %907 = vmatpush1.msra.mxu0 0.0
        %908 = vmatprep.subr.mxu0 0.0
        %909 = vmatpush1.msra.mxu0 0.0
        %910 = vmatprep.subr.mxu0 0.0
        %911 = vmatpush1.msra.mxu0 0.0
        %912 = vmatprep.subr.mxu0 0.0
        %913 = vmatpush1.msra.mxu0 0.0
        %914 = vmatprep.subr.mxu0 0.0
        %915 = vmatpush1.msra.mxu0 0.0
        %916 = vmatprep.subr.mxu0 0.0
        %917 = vmatpush1.msra.mxu0 0.0
        %918 = vmatprep.subr.mxu0 0.0
        %919 = vmatpush1.msra.mxu0 0.0
        %920 = vmatprep.subr.mxu0 0.0
        %921 = vmatpush1.msra.mxu0 0.0
        %922 = vmatprep.subr.mxu0 0.0
        %923 = vmatpush1.msra.mxu0 0.0
        %924 = vmatprep.subr.mxu0 0.0
        %925 = vmatpush1.msra.mxu0 0.0
        %926 = vmatprep.subr.mxu0 0.0
        %927 = vmatpush1.msra.mxu0 0.0
        %928 = vmatprep.subr.mxu0 0.0
        %929 = vmatpush1.msra.mxu0 0.0
        %930 = vmatprep.subr.mxu0 0.0
        %931 = vmatpush1.msra.mxu0 0.0
        %932 = vmatprep.subr.mxu0 0.0
        %933 = vmatpush1.msra.mxu0 0.0
        %934 = vmatprep.mubr.f32.mxu0 0.0
        %935 = vmatmul.mubr.f32.gmra.mrb[0].mxu0 %v862
        %v936 = vpop.f32.mrb[0].mxu0
        %v937 = vadd.f32 0.0, %v936
        %v938 = vpop.f32.mrb[0].mxu0
        %v939 = vadd.f32 0.0, %v938
        %940 = vdwg.mxu0
        %v942 = vsel %vm506, %v859, 0
        %944 = vmatprep.subr.mxu0 %v593
        %945 = vmatpush1.msra.mxu0 %v591
        %946 = vmatprep.subr.mxu0 0.0
        %947 = vmatpush1.msra.mxu0 0.0
        %948 = vmatprep.subr.mxu0 0.0
        %949 = vmatpush1.msra.mxu0 0.0
        %950 = vmatprep.subr.mxu0 0.0
        %951 = vmatpush1.msra.mxu0 0.0
        %952 = vmatprep.subr.mxu0 0.0
        %953 = vmatpush1.msra.mxu0 0.0
        %954 = vmatprep.subr.mxu0 0.0
        %955 = vmatpush1.msra.mxu0 0.0
        %956 = vmatprep.subr.mxu0 0.0
        %957 = vmatpush1.msra.mxu0 0.0
        %958 = vmatprep.subr.mxu0 0.0
        %959 = vmatpush1.msra.mxu0 0.0
        %960 = vmatprep.subr.mxu0 0.0
        %961 = vmatpush1.msra.mxu0 0.0
        %962 = vmatprep.subr.mxu0 0.0
        %963 = vmatpush1.msra.mxu0 0.0
        %964 = vmatprep.subr.mxu0 0.0
        %965 = vmatpush1.msra.mxu0 0.0
        %966 = vmatprep.subr.mxu0 0.0
        %967 = vmatpush1.msra.mxu0 0.0
        %968 = vmatprep.subr.mxu0 0.0
        %969 = vmatpush1.msra.mxu0 0.0
        %970 = vmatprep.subr.mxu0 0.0
        %971 = vmatpush1.msra.mxu0 0.0
        %972 = vmatprep.subr.mxu0 0.0
        %973 = vmatpush1.msra.mxu0 0.0
        %974 = vmatprep.subr.mxu0 0.0
        %975 = vmatpush1.msra.mxu0 0.0
        %976 = vmatprep.subr.mxu0 0.0
        %977 = vmatpush1.msra.mxu0 0.0
        %978 = vmatprep.subr.mxu0 0.0
        %979 = vmatpush1.msra.mxu0 0.0
        %980 = vmatprep.subr.mxu0 0.0
        %981 = vmatpush1.msra.mxu0 0.0
        %982 = vmatprep.subr.mxu0 0.0
        %983 = vmatpush1.msra.mxu0 0.0
        %984 = vmatprep.subr.mxu0 0.0
        %985 = vmatpush1.msra.mxu0 0.0
        %986 = vmatprep.subr.mxu0 0.0
        %987 = vmatpush1.msra.mxu0 0.0
        %988 = vmatprep.subr.mxu0 0.0
        %989 = vmatpush1.msra.mxu0 0.0
        %990 = vmatprep.subr.mxu0 0.0
        %991 = vmatpush1.msra.mxu0 0.0
        %992 = vmatprep.subr.mxu0 0.0
        %993 = vmatpush1.msra.mxu0 0.0
        %994 = vmatprep.subr.mxu0 0.0
        %995 = vmatpush1.msra.mxu0 0.0
        %996 = vmatprep.subr.mxu0 0.0
        %997 = vmatpush1.msra.mxu0 0.0
        %998 = vmatprep.subr.mxu0 0.0
        %999 = vmatpush1.msra.mxu0 0.0
        %1000 = vmatprep.subr.mxu0 0.0
        %1001 = vmatpush1.msra.mxu0 0.0
        %1002 = vmatprep.subr.mxu0 0.0
        %1003 = vmatpush1.msra.mxu0 0.0
        %1004 = vmatprep.subr.mxu0 0.0
        %1005 = vmatpush1.msra.mxu0 0.0
        %1006 = vmatprep.subr.mxu0 0.0
        %1007 = vmatpush1.msra.mxu0 0.0
        %1008 = vmatprep.mubr.f32.mxu0 0.0
        %1009 = vmatmul.mubr.f32.gmra.mrb[0].mxu0 %v942
        %v1010 = vpop.f32.mrb[0].mxu0
        %v1011 = vadd.f32 %v937, %v1010
        %v1012 = vpop.f32.mrb[0].mxu0
        %v1013 = vadd.f32 %v939, %v1012
        %1014 = vdwg.mxu0
        %v1015 = vld [vmem:[%s10] sm:$0xf]
        %1017 = vset.pattern.permute.xlu0 0
        %1018 = vperm.xlu0 %1017, %v1015
        %v1019 = vpop.permute.xlu0 %1018
        %v1021 = vadd.f32 %v1011, %v1019
        %v1022 = vadd.f32 %v1013, %v1019
        %v1023 = vtanh.pop %v1021
        %v1024 = vtanh.pop %v1022
        %v1025 = vsub.f32 %v1023, %v501
        %v1026 = vsub.f32 %v1024, %v505
        %v1027 = vmul.f32 %v853, %v1025
        %v1028 = vmul.f32 %v855, %v1026
        %v1031 = vcombine.low %v1027, %v1028
        %v1033 = vadd.f32 %v501, %v1031
        %1034 = vst [vmem:[%s486] sm:$0xff] %v1033
        %v1035 = vadd.f32 %v500, %v1033
        %1036 = vst [vmem:[%s479] sm:$0xff] %v1035
        %s1037 = sand.u32 %s300, 1
        %s1038 = scalar_lea.sflag [#allocation4], %s1037
        %s1039 = sand.u32 %s300, 1
        %s1040 = smul.addr %s1039, 8
        %s1041 = scalar_lea.vmem [#allocation5], %s1040
        %s1042 = sand.u32 %s328, 1
        %s1043 = scalar_lea.sflag [#allocation7], %s1042
        %s1044 = sand.u32 %s328, 1
        %s1045 = smul.addr %s1044, 8
        %s1046 = scalar_lea.vmem [#allocation6], %s1045
        // Predicated region
        $region69: #{tpu_custom_call.1} parent=63 // pred_check
          %p1047 = pneg %p310
        $region70: #{tpu_custom_call.1} parent=63 // pred_check_branch
          %1049 = sbr.rel (%p1047) target = $region72
        $region71: #{tpu_custom_call.1} parent=63 // pred_region
          %s1050 = smul.u32 2, %s38
          %s1052 = ssub.s32 128, 128
          %1053 = vsyncadd %s1038, %s1052
          %s1054 = smul.addr %s37, 2
          %s1055 = sadd.s32 %s1050, %s1054
          %s1056 = smul.addr %s1055, 64
          %s1057 = scalar_lea.hbm %s11, %s1056
          %s1059 = sshll.u32 %s1041, 4
          %s1060 = int_to_ptr.vmem [resolvable:$true] %s1059
          %1062 = dma.vmem_to_hbm [thread:$0]  %s1060, 128, %s1057, %s1038
        $region72: #{tpu_custom_call.1} parent=63 // pred_fallthru
          _
        // Predicated region
        $region73: #{tpu_custom_call.1} parent=63 // pred_check
          %p1063 = pneg %p338
        $region74: #{tpu_custom_call.1} parent=63 // pred_check_branch
          %1065 = sbr.rel (%p1063) target = $region76
        $region75: #{tpu_custom_call.1} parent=63 // pred_region
          %s1066 = smul.u32 2, %s38
          %s1068 = ssub.s32 128, 128
          %1069 = vsyncadd %s1043, %s1068
          %s1070 = smul.addr %s37, 2
          %s1071 = sadd.s32 %s1066, %s1070
          %s1072 = smul.addr %s1071, 64
          %s1073 = scalar_lea.hbm %s12, %s1072
          %s1075 = sshll.u32 %s1046, 4
          %s1076 = int_to_ptr.vmem [resolvable:$true] %s1075
          %1078 = dma.vmem_to_hbm [thread:$0]  %s1076, 128, %s1073, %s1043
        $region76: #{tpu_custom_call.1} parent=63 // pred_fallthru
          _
      $region64: #{tpu_custom_call.1} parent=5 // pred_fallthru
        _
      %p1079 = scmp.le.s32.totalorder 2, %s28
      // Predicated region
      $region77: #{tpu_custom_call.1} parent=5 // pred_check
        %p1080 = pneg %p1079
      $region78: #{tpu_custom_call.1} parent=5 // pred_check_branch
        %1082 = sbr.rel (%p1080) target = $region80
      $region79: #{tpu_custom_call.1} parent=5 // pred_region
        %s1083 = ssub.s32 %s28, 2
        // Predicated region
        $region81: #{tpu_custom_call.1} parent=79 // pred_check
          %p1084 = pneg %p316
        $region82: #{tpu_custom_call.1} parent=79 // pred_check_branch
          %1086 = sbr.rel (%p1084) target = $region84
        $region83: #{tpu_custom_call.1} parent=79 // pred_region
          %s1087 = sand.u32 %s301, 1
          %s1088 = scalar_lea.sflag [#allocation4], %s1087
          %s1089 = sand.u32 %s301, 1
          %s1090 = smul.addr %s1089, 8
          %s1091 = scalar_lea.vmem [#allocation5], %s1090
          %1092 = dma.done %s1088, 128
        $region84: #{tpu_custom_call.1} parent=79 // pred_fallthru
          _
        // Predicated region
        $region85: #{tpu_custom_call.1} parent=79 // pred_check
          %p1093 = pneg %p344
        $region86: #{tpu_custom_call.1} parent=79 // pred_check_branch
          %1095 = sbr.rel (%p1093) target = $region88
        $region87: #{tpu_custom_call.1} parent=79 // pred_region
          %s1096 = sand.u32 %s329, 1
          %s1097 = scalar_lea.sflag [#allocation7], %s1096
          %s1098 = sand.u32 %s329, 1
          %s1099 = smul.addr %s1098, 8
          %s1100 = scalar_lea.vmem [#allocation6], %s1099
          %1101 = dma.done %s1097, 128
        $region88: #{tpu_custom_call.1} parent=79 // pred_fallthru
          _
      $region80: #{tpu_custom_call.1} parent=5 // pred_fallthru
        _
    $region6: #{tpu_custom_call.1} parent=1 // loop_footer
      %s32 = sadd.s32 1, %s28
    $region7: #{tpu_custom_call.1} parent=1 // loop_footer_branch
      %27 = sbr.rel target = $region3
    $region8: #{tpu_custom_call.1} parent=1 // loop_exit
      _
    %1102 = vsyncpa [#allocation3], 1
    %s1103 = scalar_lea.sflag [#allocation3], 1
    %1104 = vsyncpa %s1103, 1
    %1105 = vsyncpa [#allocation4], 1
    %s1106 = scalar_lea.sflag [#allocation4], 1
    %1107 = vsyncpa %s1106, 1
    %1108 = vsyncpa [#allocation7], 1
    %s1109 = scalar_lea.sflag [#allocation7], 1
    %1110 = vsyncpa %s1109, 1

</llo_original>
